<compile_context>
chip_gen: v7x
topology: tpu7x:2x2x1
jax: 0.10.0
libtpu: 0.0.40
codegen_flags: <defaults>
</compile_context>

<pallas_src>
import jax
import jax.numpy as jnp
from jax.experimental import pallas as pl
from jax.experimental.pallas import tpu as pltpu


# Upper bound on the batch tile (lane axis).  Per-sample working set is
# ~160 B, so even TB=8192 double-buffered across 4 batch-tiled inputs is only
# a few MiB — far under the 32 MiB default scoped VMEM and v7x's 64 MiB/TC.
MAX_TB = 8192


def _round_up(x, m):
    return ((x + m - 1) // m) * m


def neumf_kernel(ug_ref, ig_ref, um_ref, im_ref,
                 w0u_ref, w0i_ref, b0_ref, w1_ref, b1_ref,
                 wpg_ref, wpm_ref, bp_ref,
                 out_ref):
    """NeuMF head over one feature-major batch tile of TB columns."""
    # --- GMF branch: bf16 loads (halved HBM read), f32 VPU math; the GMF half
    # of the prediction is reduced immediately so the (Dg, TB) temporary does
    # not stay live across the MLP matmuls.
    gmf = ug_ref[...].astype(jnp.float32) * ig_ref[...].astype(jnp.float32)
    pred = jnp.sum(gmf * wpg_ref[...], axis=0, keepdims=True)        # (1, TB) f32

    # --- MLP branch.  The user|item concat is fused away: layer 0 is two bf16
    # MXU matmuls over the split K-halves of W0, accumulated in f32.
    h = (jnp.dot(w0u_ref[...], um_ref[...], preferred_element_type=jnp.float32)
         + jnp.dot(w0i_ref[...], im_ref[...], preferred_element_type=jnp.float32))
    h = jnp.maximum(h + b0_ref[...], 0.0)                            # (H0, TB) f32

    h = jnp.dot(w1_ref[...], h.astype(w1_ref.dtype),
                preferred_element_type=jnp.float32)                  # (H1, TB) f32
    h = jnp.maximum(h + b1_ref[...], 0.0)

    # --- Predict layer (output width 1): VPU multiply + sublane (XLU) reduce
    # over the split predict-weight columns — no N=1 MXU matmul per tile.
    pred = pred + jnp.sum(h * wpm_ref[...], axis=0, keepdims=True) + bp_ref[...]
    out_ref[...] = pred                                              # lane-dense store


def neumf_forward(user, item, params, *, max_tb=MAX_TB):
    """user, item: int32 index vectors of shape (B,). Returns (B,) float32."""
    B = int(user.shape[0])

    # Batch tile on the lane axis: as large as possible (amortize per-step
    # overhead) while keeping cdiv(B, tb) >= 2 whenever the batch allows it
    # (v7x megacore shards the "parallel" grid axis across its 2 TCs).
    tb = min(max_tb, max(128, _round_up(pl.cdiv(B, 2), 128)))
    n_tiles = pl.cdiv(B, tb)

    # Embedding lookups from feature-major (D, num) tables -> activations are
    # already (D, B): no transpose pass, no pad pass, no concat pass in HBM.
    # (Gather stays in the wrapper: with 32-byte rows, per-row DMAs in-kernel
    # would be descriptor-bound.)
    ug = jnp.take(params["embed_user_GMF"], user, axis=1)            # (Dg, B) bf16
    ig = jnp.take(params["embed_item_GMF"], item, axis=1)            # (Dg, B) bf16
    um = jnp.take(params["embed_user_MLP"], user, axis=1)            # (Dm, B) bf16
    im = jnp.take(params["embed_item_MLP"], item, axis=1)            # (Dm, B) bf16

    dg = ug.shape[0]
    dm = um.shape[0]
    w0 = params["mlp_w0"]                     # (H0, 2Dm) bf16 (torch [out,in] layout)
    w0u, w0i = w0[:, :dm], w0[:, dm:]         # concat fused away: split K-halves
    b0 = params["mlp_b0"][:, None]            # (H0, 1) f32
    w1 = params["mlp_w1"]                     # (H1, H0) bf16
    b1 = params["mlp_b1"][:, None]            # (H1, 1) f32
    wp = params["pred_w"]                     # (1, Dg+H1) f32
    wpg = wp[:, :dg].T                        # (Dg, 1) f32  (GMF half)
    wpm = wp[:, dg:].T                        # (H1, 1) f32  (MLP half)
    bp = params["pred_b"][:, None]            # (1, 1) f32
    h0, h1 = w0.shape[0], w1.shape[0]

    # Batch-tiled activations / output walk the grid; the ragged last tile is
    # handled by Pallas (OOB reads are garbage confined to discarded columns,
    # OOB output writes are dropped — nothing reduces across the batch axis).
    # Weights & biases use a constant index_map so they are DMA'd once and
    # stay VMEM-resident across tiles.
    def batch_spec(d):
        return pl.BlockSpec((d, tb), lambda i: (0, i))

    def const_spec(shape):
        return pl.BlockSpec(shape, lambda i: (0, 0))

    out = pl.pallas_call(
        neumf_kernel,
        out_shape=jax.ShapeDtypeStruct((1, B), jnp.float32),
        grid=(n_tiles,),
        in_specs=[
            batch_spec(dg),             # ug  (Dg, B)
            batch_spec(dg),             # ig  (Dg, B)
            batch_spec(dm),             # um  (Dm, B)
            batch_spec(dm),             # im  (Dm, B)
            const_spec((h0, dm)),       # w0u
            const_spec((h0, dm)),       # w0i
            const_spec((h0, 1)),        # b0
            const_spec((h1, h0)),       # w1
            const_spec((h1, 1)),        # b1
            const_spec((dg, 1)),        # wpg
            const_spec((h1, 1)),        # wpm
            const_spec((1, 1)),         # bp
        ],
        out_specs=pl.BlockSpec((1, tb), lambda i: (0, i)),
        compiler_params=pltpu.CompilerParams(
            dimension_semantics=("parallel",)),
    )(ug, ig, um, im, w0u, w0i, b0, w1, b1, wpg, wpm, bp)

    return out.reshape(-1)                    # == prediction.view(-1), shape (B,)


def init_params(key, user_num, item_num, dim_gmf, dim_mlp, hidden):
    ks = jax.random.split(key, 8)
    h0, h1 = hidden

    def xavier(k, fan_out, fan_in):
        lim = (6.0 / (fan_in + fan_out)) ** 0.5
        return jax.random.uniform(k, (fan_out, fan_in), jnp.float32, -lim, lim)

    params = {
        # Feature-major (D, num) embedding tables: the wrapper gather then
        # yields (D, B) activations directly (no transpose HBM pass).
        # GMF tables: deterministic stand-in for the TransE pickle load; kept
        # bf16 so the dominant HBM read is halved (kernel upcasts to f32).
        "embed_user_GMF": jax.random.normal(
            ks[0], (dim_gmf, user_num), jnp.float32).astype(jnp.bfloat16),
        "embed_item_GMF": jax.random.normal(
            ks[1], (dim_gmf, item_num), jnp.float32).astype(jnp.bfloat16),
        # MLP tables: normal(std=0.01) like the torch init; bf16 (MXU operands).
        "embed_user_MLP": (0.01 * jax.random.normal(
            ks[2], (dim_mlp, user_num), jnp.float32)).astype(jnp.bfloat16),
        "embed_item_MLP": (0.01 * jax.random.normal(
            ks[3], (dim_mlp, item_num), jnp.float32)).astype(jnp.bfloat16),
        # MLP linears in torch-native [out, in] layout; bf16 weights, f32 biases.
        "mlp_w0": xavier(ks[4], h0, 2 * dim_mlp).astype(jnp.bfloat16),
        "mlp_b0": jnp.zeros((h0,), jnp.float32),
        "mlp_w1": xavier(ks[5], h1, h0).astype(jnp.bfloat16),
        "mlp_b1": jnp.zeros((h1,), jnp.float32),
        # Predict layer stays f32 (it runs on the VPU reduce path, not the MXU).
        "pred_w": xavier(ks[6], 1, dim_gmf + h1),
        "pred_b": jnp.zeros((1,), jnp.float32),
    }
    return params


if __name__ == "__main__":
    key = jax.random.PRNGKey(0)
    k_param, k_user, k_item = jax.random.split(key, 3)

    user_num, item_num = 32, 48
    dim_gmf, dim_mlp = 16, 16
    hidden = [32, 16]
    batch = 8

    params = init_params(k_param, user_num, item_num, dim_gmf, dim_mlp, hidden)

    user = jax.random.randint(k_user, (batch,), 0, user_num, dtype=jnp.int32)
    item = jax.random.randint(k_item, (batch,), 0, item_num, dtype=jnp.int32)

    pred = neumf_forward(user, item, params)
    jax.block_until_ready(pred)

    # Pure-JAX reference (identical numerics: bf16 MXU operands, f32 acc,
    # f32 elementwise, split-K layer 0, mul+reduce predict) to sanity-check.
    ug = jnp.take(params["embed_user_GMF"], user, axis=1).astype(jnp.float32)
    ig = jnp.take(params["embed_item_GMF"], item, axis=1).astype(jnp.float32)
    um = jnp.take(params["embed_user_MLP"], user, axis=1)
    im = jnp.take(params["embed_item_MLP"], item, axis=1)
    gmf = ug * ig                                                   # (Dg, B) f32
    w0 = params["mlp_w0"]
    h = (jnp.dot(w0[:, :dim_mlp], um, preferred_element_type=jnp.float32)
         + jnp.dot(w0[:, dim_mlp:], im, preferred_element_type=jnp.float32))
    h = jnp.maximum(h + params["mlp_b0"][:, None], 0.0)
    h = jnp.dot(params["mlp_w1"], h.astype(jnp.bfloat16),
                preferred_element_type=jnp.float32)
    h = jnp.maximum(h + params["mlp_b1"][:, None], 0.0)
    wp = params["pred_w"]
    ref = ((gmf * wp[0, :dim_gmf, None]).sum(0)
           + (h * wp[0, dim_gmf:, None]).sum(0)
           + params["pred_b"][0])

    assert pred.shape == (batch,)
    assert jnp.allclose(pred, ref, atol=1e-3, rtol=1e-3), (pred, ref)
    print("KERNEL_OK")
</pallas_src>

<mosaic_0001>
module attributes {stable_mosaic.version = 11 : i64} {
  func.func @neumf_kernel(%arg0: i32, %arg1: memref<16x128xbf16, #tpu.memory_space<vmem>>, %arg2: memref<16x128xbf16, #tpu.memory_space<vmem>>, %arg3: memref<16x128xbf16, #tpu.memory_space<vmem>>, %arg4: memref<16x128xbf16, #tpu.memory_space<vmem>>, %arg5: memref<32x16xbf16, #tpu.memory_space<vmem>>, %arg6: memref<32x16xbf16, #tpu.memory_space<vmem>>, %arg7: memref<32x1xf32, #tpu.memory_space<vmem>>, %arg8: memref<16x32xbf16, #tpu.memory_space<vmem>>, %arg9: memref<16x1xf32, #tpu.memory_space<vmem>>, %arg10: memref<16x1xf32, #tpu.memory_space<vmem>>, %arg11: memref<16x1xf32, #tpu.memory_space<vmem>>, %arg12: memref<1x1xf32, #tpu.memory_space<vmem>>, %arg13: memref<1x128xf32, #tpu.memory_space<vmem>>) attributes {dimension_semantics = [#tpu.dimension_semantics<parallel>], iteration_bounds = array<i64: 1>, scalar_prefetch = 0 : i64, scratch_operands = 0 : i64, tpu.core_type = #tpu.core_type<tc>, window_params = [{transform_indices = @transform_0, window_bounds = array<i64: 16, 128>}, {transform_indices = @transform_1, window_bounds = array<i64: 16, 128>}, {transform_indices = @transform_2, window_bounds = array<i64: 16, 128>}, {transform_indices = @transform_3, window_bounds = array<i64: 16, 128>}, {pipeline_mode = #tpu.pipeline_mode<synchronous>, transform_indices = @transform_4, window_bounds = array<i64: 32, 16>}, {pipeline_mode = #tpu.pipeline_mode<synchronous>, transform_indices = @transform_5, window_bounds = array<i64: 32, 16>}, {pipeline_mode = #tpu.pipeline_mode<synchronous>, transform_indices = @transform_6, window_bounds = array<i64: 32, 1>}, {pipeline_mode = #tpu.pipeline_mode<synchronous>, transform_indices = @transform_7, window_bounds = array<i64: 16, 32>}, {pipeline_mode = #tpu.pipeline_mode<synchronous>, transform_indices = @transform_8, window_bounds = array<i64: 16, 1>}, {pipeline_mode = #tpu.pipeline_mode<synchronous>, transform_indices = @transform_9, window_bounds = array<i64: 16, 1>}, {pipeline_mode = #tpu.pipeline_mode<synchronous>, transform_indices = @transform_10, window_bounds = array<i64: 16, 1>}, {pipeline_mode = #tpu.pipeline_mode<synchronous>, transform_indices = @transform_11, window_bounds = array<i64: 1, 1>}, {transform_indices = @transform_12, window_bounds = array<i64: 1, 128>}]} {
    %c0 = arith.constant 0 : index
    %c0_0 = arith.constant 0 : index
    %0 = vector.load %arg1[%c0, %c0_0] : memref<16x128xbf16, #tpu.memory_space<vmem>>, vector<16x128xbf16>
    %1 = arith.extf %0 : vector<16x128xbf16> to vector<16x128xf32>
    %c0_1 = arith.constant 0 : index
    %c0_2 = arith.constant 0 : index
    %2 = vector.load %arg2[%c0_1, %c0_2] : memref<16x128xbf16, #tpu.memory_space<vmem>>, vector<16x128xbf16>
    %3 = arith.extf %2 : vector<16x128xbf16> to vector<16x128xf32>
    %4 = arith.mulf %1, %3 : vector<16x128xf32>
    %c0_3 = arith.constant 0 : index
    %c0_4 = arith.constant 0 : index
    %5 = vector.load %arg10[%c0_3, %c0_4] : memref<16x1xf32, #tpu.memory_space<vmem>>, vector<16x1xf32>
    %6 = vector.broadcast %5 : vector<16x1xf32> to vector<16x128xf32>
    %7 = arith.mulf %4, %6 : vector<16x128xf32>
    %cst = arith.constant dense<0.000000e+00> : vector<128xf32>
    %8 = vector.multi_reduction <add>, %7, %cst [0] : vector<16x128xf32> to vector<128xf32>
    %9 = vector.shape_cast %8 : vector<128xf32> to vector<1x128xf32>
    %c0_5 = arith.constant 0 : index
    %c0_6 = arith.constant 0 : index
    %10 = vector.load %arg5[%c0_5, %c0_6] : memref<32x16xbf16, #tpu.memory_space<vmem>>, vector<32x16xbf16>
    %c0_7 = arith.constant 0 : index
    %c0_8 = arith.constant 0 : index
    %11 = vector.load %arg3[%c0_7, %c0_8] : memref<16x128xbf16, #tpu.memory_space<vmem>>, vector<16x128xbf16>
    %cst_9 = arith.constant dense<0.000000e+00> : vector<32x128xf32>
    %12 = tpu.matmul %10, %11, %cst_9 {dimension_numbers = #tpu.dot_dimension_numbers<[1], [0], [0], [1], [0, 0, 1, 1], [], []>} : vector<32x16xbf16>, vector<16x128xbf16>, vector<32x128xf32> -> vector<32x128xf32>
    %c0_10 = arith.constant 0 : index
    %c0_11 = arith.constant 0 : index
    %13 = vector.load %arg6[%c0_10, %c0_11] : memref<32x16xbf16, #tpu.memory_space<vmem>>, vector<32x16xbf16>
    %c0_12 = arith.constant 0 : index
    %c0_13 = arith.constant 0 : index
    %14 = vector.load %arg4[%c0_12, %c0_13] : memref<16x128xbf16, #tpu.memory_space<vmem>>, vector<16x128xbf16>
    %cst_14 = arith.constant dense<0.000000e+00> : vector<32x128xf32>
    %15 = tpu.matmul %13, %14, %cst_14 {dimension_numbers = #tpu.dot_dimension_numbers<[1], [0], [0], [1], [0, 0, 1, 1], [], []>} : vector<32x16xbf16>, vector<16x128xbf16>, vector<32x128xf32> -> vector<32x128xf32>
    %16 = arith.addf %12, %15 : vector<32x128xf32>
    %c0_15 = arith.constant 0 : index
    %c0_16 = arith.constant 0 : index
    %17 = vector.load %arg7[%c0_15, %c0_16] : memref<32x1xf32, #tpu.memory_space<vmem>>, vector<32x1xf32>
    %18 = vector.broadcast %17 : vector<32x1xf32> to vector<32x128xf32>
    %19 = arith.addf %16, %18 : vector<32x128xf32>
    %cst_17 = arith.constant 0.000000e+00 : f32
    %20 = vector.broadcast %cst_17 : f32 to vector<32x128xf32>
    %21 = arith.maximumf %19, %20 : vector<32x128xf32>
    %c0_18 = arith.constant 0 : index
    %c0_19 = arith.constant 0 : index
    %22 = vector.load %arg8[%c0_18, %c0_19] : memref<16x32xbf16, #tpu.memory_space<vmem>>, vector<16x32xbf16>
    %23 = arith.truncf %21 : vector<32x128xf32> to vector<32x128xbf16>
    %cst_20 = arith.constant dense<0.000000e+00> : vector<16x128xf32>
    %24 = tpu.matmul %22, %23, %cst_20 {dimension_numbers = #tpu.dot_dimension_numbers<[1], [0], [0], [1], [0, 0, 1, 1], [], []>} : vector<16x32xbf16>, vector<32x128xbf16>, vector<16x128xf32> -> vector<16x128xf32>
    %c0_21 = arith.constant 0 : index
    %c0_22 = arith.constant 0 : index
    %25 = vector.load %arg9[%c0_21, %c0_22] : memref<16x1xf32, #tpu.memory_space<vmem>>, vector<16x1xf32>
    %26 = vector.broadcast %25 : vector<16x1xf32> to vector<16x128xf32>
    %27 = arith.addf %24, %26 : vector<16x128xf32>
    %cst_23 = arith.constant 0.000000e+00 : f32
    %28 = vector.broadcast %cst_23 : f32 to vector<16x128xf32>
    %29 = arith.maximumf %27, %28 : vector<16x128xf32>
    %c0_24 = arith.constant 0 : index
    %c0_25 = arith.constant 0 : index
    %30 = vector.load %arg11[%c0_24, %c0_25] : memref<16x1xf32, #tpu.memory_space<vmem>>, vector<16x1xf32>
    %31 = vector.broadcast %30 : vector<16x1xf32> to vector<16x128xf32>
    %32 = arith.mulf %29, %31 : vector<16x128xf32>
    %cst_26 = arith.constant dense<0.000000e+00> : vector<128xf32>
    %33 = vector.multi_reduction <add>, %32, %cst_26 [0] : vector<16x128xf32> to vector<128xf32>
    %34 = vector.shape_cast %33 : vector<128xf32> to vector<1x128xf32>
    %35 = arith.addf %9, %34 : vector<1x128xf32>
    %c0_27 = arith.constant 0 : index
    %c0_28 = arith.constant 0 : index
    %36 = vector.load %arg12[%c0_27, %c0_28] : memref<1x1xf32, #tpu.memory_space<vmem>>, vector<1x1xf32>
    %37 = vector.broadcast %36 : vector<1x1xf32> to vector<1x128xf32>
    %38 = arith.addf %35, %37 : vector<1x128xf32>
    %c0_29 = arith.constant 0 : index
    %c0_30 = arith.constant 0 : index
    %39 = vector.load %arg13[%c0_29, %c0_30] : memref<1x128xf32, #tpu.memory_space<vmem>>, vector<1x128xf32>
    tpu.vector_store %arg13[%c0_29, %c0_30], %38 {strides = array<i32>} : memref<1x128xf32, #tpu.memory_space<vmem>>, vector<1x128xf32>,
    return
  }
  func.func @transform_0(%arg0: i32) -> (i32, i32) {
    %c0_i32 = arith.constant 0 : i32
    %c0_i32_0 = arith.constant 0 : i32
    return %c0_i32, %arg0 : i32, i32
  }
  func.func @transform_1(%arg0: i32) -> (i32, i32) {
    %c0_i32 = arith.constant 0 : i32
    %c0_i32_0 = arith.constant 0 : i32
    return %c0_i32, %arg0 : i32, i32
  }
  func.func @transform_2(%arg0: i32) -> (i32, i32) {
    %c0_i32 = arith.constant 0 : i32
    %c0_i32_0 = arith.constant 0 : i32
    return %c0_i32, %arg0 : i32, i32
  }
  func.func @transform_3(%arg0: i32) -> (i32, i32) {
    %c0_i32 = arith.constant 0 : i32
    %c0_i32_0 = arith.constant 0 : i32
    return %c0_i32, %arg0 : i32, i32
  }
  func.func @transform_4(%arg0: i32) -> (i32, i32) {
    %c0_i32 = arith.constant 0 : i32
    %c0_i32_0 = arith.constant 0 : i32
    %c0_i32_1 = arith.constant 0 : i32
    return %c0_i32, %c0_i32_0 : i32, i32
  }
  func.func @transform_5(%arg0: i32) -> (i32, i32) {
    %c0_i32 = arith.constant 0 : i32
    %c0_i32_0 = arith.constant 0 : i32
    %c0_i32_1 = arith.constant 0 : i32
    return %c0_i32, %c0_i32_0 : i32, i32
  }
  func.func @transform_6(%arg0: i32) -> (i32, i32) {
    %c0_i32 = arith.constant 0 : i32
    %c0_i32_0 = arith.constant 0 : i32
    %c0_i32_1 = arith.constant 0 : i32
    return %c0_i32, %c0_i32_0 : i32, i32
  }
  func.func @transform_7(%arg0: i32) -> (i32, i32) {
    %c0_i32 = arith.constant 0 : i32
    %c0_i32_0 = arith.constant 0 : i32
    %c0_i32_1 = arith.constant 0 : i32
    return %c0_i32, %c0_i32_0 : i32, i32
  }
  func.func @transform_8(%arg0: i32) -> (i32, i32) {
    %c0_i32 = arith.constant 0 : i32
    %c0_i32_0 = arith.constant 0 : i32
    %c0_i32_1 = arith.constant 0 : i32
    return %c0_i32, %c0_i32_0 : i32, i32
  }
  func.func @transform_9(%arg0: i32) -> (i32, i32) {
    %c0_i32 = arith.constant 0 : i32
    %c0_i32_0 = arith.constant 0 : i32
    %c0_i32_1 = arith.constant 0 : i32
    return %c0_i32, %c0_i32_0 : i32, i32
  }
  func.func @transform_10(%arg0: i32) -> (i32, i32) {
    %c0_i32 = arith.constant 0 : i32
    %c0_i32_0 = arith.constant 0 : i32
    %c0_i32_1 = arith.constant 0 : i32
    return %c0_i32, %c0_i32_0 : i32, i32
  }
  func.func @transform_11(%arg0: i32) -> (i32, i32) {
    %c0_i32 = arith.constant 0 : i32
    %c0_i32_0 = arith.constant 0 : i32
    %c0_i32_1 = arith.constant 0 : i32
    return %c0_i32, %c0_i32_0 : i32, i32
  }
  func.func @transform_12(%arg0: i32) -> (i32, i32) {
    %c0_i32 = arith.constant 0 : i32
    %c0_i32_0 = arith.constant 0 : i32
    return %c0_i32, %arg0 : i32, i32
  }
}

</mosaic_0001>

<llo_original>
// kernel: tpu_custom_call.1
$region0: #{tpu_custom_call.1}
  #allocation0 [shape = 'u32[]', space=smem, size = 0x4, offset = 0x4, fixed_abs, tag = 'smem constant byte address 0x4 - core index']
  #allocation1 [shape = 'u32[144,128]{1,0:T(1,128)}', space=vmem, size = 0x12000, scoped, tag = 'internal scratch']
  #allocation2 [shape = 'f32[1,1]{1,0:T(1,128)S(1)}', space=vmem, size = 0x200, scoped, tag = 'scoped memory for tpu_custom_call.1']
  %s0 = inlined_call_operand.vmem [shape: bf16[16,8], index: 0, kind: input, shape index: {}]
  %s1 = inlined_call_operand.vmem [shape: bf16[16,8], index: 1, kind: input, shape index: {}]
  %s2 = inlined_call_operand.vmem [shape: bf16[16,8], index: 2, kind: input, shape index: {}]
  %s3 = inlined_call_operand.vmem [shape: bf16[16,8], index: 3, kind: input, shape index: {}]
  %s4 = inlined_call_operand.vmem [shape: bf16[32,16], index: 4, kind: input, shape index: {}]
  %s5 = inlined_call_operand.vmem [shape: bf16[32,16], index: 5, kind: input, shape index: {}]
  %s6 = inlined_call_operand.vmem [shape: f32[32,1], index: 6, kind: input, shape index: {}]
  %s7 = inlined_call_operand.vmem [shape: bf16[16,32], index: 7, kind: input, shape index: {}]
  %s8 = inlined_call_operand.vmem [shape: f32[16,1], index: 8, kind: input, shape index: {}]
  %s9 = inlined_call_operand.vmem [shape: f32[16,1], index: 9, kind: input, shape index: {}]
  %s10 = inlined_call_operand.vmem [shape: f32[16,1], index: 10, kind: input, shape index: {}]
  %s11 = inlined_call_operand.<no memory space> [shape: f32[1,1], index: 11, kind: input, shape index: {}]
  %s12 = inlined_call_operand.hbm [shape: f32[1,8], index: 12, kind: output, shape index: {}]
  %s13 = sld [smem:[#allocation0]]
  $region58: #{tpu_custom_call.1} parent=0
    _
  %s15 = ssub.s32 1, %s13
  %s16 = scalar_select 0, %s15, %s13
  %v17 = vstv %s11
  %18 = vst [vmem:[#allocation2] sm:$0x1] %v17
  $region1: #{tpu_custom_call.1} parent=0
    #allocation3 [shape = 'u8[512]{0}', space=vmem, size = 0x400, scoped, tag = 'output window, operand 0, single buffered']
    #allocation4 [shape = 's32[1]{0}', space=sflag, size = 0x4, scoped, tag = 'scoped memory for tpu_custom_call.1']
    %19 = vsyncpa [#allocation4], 0
    // Predicated region
    $region2: #{tpu_custom_call.1} parent=1 // pred_check
      _
    $region3: #{tpu_custom_call.1} parent=1 // pred_check_branch
      %21 = sbr.rel (0) target = $region5
    $region4: #{tpu_custom_call.1} parent=1 // pred_region
      _
    $region5: #{tpu_custom_call.1} parent=1 // pred_fallthru
      _
    // Predicated region
    $region6: #{tpu_custom_call.1} parent=1 // pred_check
      _
    $region7: #{tpu_custom_call.1} parent=1 // pred_check_branch
      %23 = sbr.rel (0) target = $region9
    $region8: #{tpu_custom_call.1} parent=1 // pred_region
      _
    $region9: #{tpu_custom_call.1} parent=1 // pred_fallthru
      _
    // Predicated region
    $region10: #{tpu_custom_call.1} parent=1 // pred_check
      _
    $region11: #{tpu_custom_call.1} parent=1 // pred_check_branch
      %25 = sbr.rel (0) target = $region13
    $region12: #{tpu_custom_call.1} parent=1 // pred_region
      _
    $region13: #{tpu_custom_call.1} parent=1 // pred_fallthru
      _
    // Predicated region
    $region14: #{tpu_custom_call.1} parent=1 // pred_check
      _
    $region15: #{tpu_custom_call.1} parent=1 // pred_check_branch
      %27 = sbr.rel (0) target = $region17
    $region16: #{tpu_custom_call.1} parent=1 // pred_region
      _
    $region17: #{tpu_custom_call.1} parent=1 // pred_fallthru
      _
    // Predicated region
    $region18: #{tpu_custom_call.1} parent=1 // pred_check
      _
    $region19: #{tpu_custom_call.1} parent=1 // pred_check_branch
      %29 = sbr.rel (0) target = $region21
    $region20: #{tpu_custom_call.1} parent=1 // pred_region
      _
    $region21: #{tpu_custom_call.1} parent=1 // pred_fallthru
      _
    // Predicated region
    $region22: #{tpu_custom_call.1} parent=1 // pred_check
      _
    $region23: #{tpu_custom_call.1} parent=1 // pred_check_branch
      %31 = sbr.rel (0) target = $region25
    $region24: #{tpu_custom_call.1} parent=1 // pred_region
      _
    $region25: #{tpu_custom_call.1} parent=1 // pred_fallthru
      _
    // Predicated region
    $region26: #{tpu_custom_call.1} parent=1 // pred_check
      _
    $region27: #{tpu_custom_call.1} parent=1 // pred_check_branch
      %33 = sbr.rel (0) target = $region29
    $region28: #{tpu_custom_call.1} parent=1 // pred_region
      _
    $region29: #{tpu_custom_call.1} parent=1 // pred_fallthru
      _
    // Predicated region
    $region30: #{tpu_custom_call.1} parent=1 // pred_check
      _
    $region31: #{tpu_custom_call.1} parent=1 // pred_check_branch
      %35 = sbr.rel (0) target = $region33
    $region32: #{tpu_custom_call.1} parent=1 // pred_region
      _
    $region33: #{tpu_custom_call.1} parent=1 // pred_fallthru
      _
    // Predicated region
    $region34: #{tpu_custom_call.1} parent=1 // pred_check
      _
    $region35: #{tpu_custom_call.1} parent=1 // pred_check_branch
      %37 = sbr.rel (0) target = $region37
    $region36: #{tpu_custom_call.1} parent=1 // pred_region
      _
    $region37: #{tpu_custom_call.1} parent=1 // pred_fallthru
      _
    // Predicated region
    $region38: #{tpu_custom_call.1} parent=1 // pred_check
      _
    $region39: #{tpu_custom_call.1} parent=1 // pred_check_branch
      %39 = sbr.rel (0) target = $region41
    $region40: #{tpu_custom_call.1} parent=1 // pred_region
      _
    $region41: #{tpu_custom_call.1} parent=1 // pred_fallthru
      _
    // Predicated region
    $region42: #{tpu_custom_call.1} parent=1 // pred_check
      _
    $region43: #{tpu_custom_call.1} parent=1 // pred_check_branch
      %41 = sbr.rel (0) target = $region45
    $region44: #{tpu_custom_call.1} parent=1 // pred_region
      _
    $region45: #{tpu_custom_call.1} parent=1 // pred_fallthru
      _
    // Predicated region
    $region46: #{tpu_custom_call.1} parent=1 // pred_check
      _
    $region47: #{tpu_custom_call.1} parent=1 // pred_check_branch
      %43 = sbr.rel (0) target = $region49
    $region48: #{tpu_custom_call.1} parent=1 // pred_region
      _
    $region49: #{tpu_custom_call.1} parent=1 // pred_fallthru
      _
    %v45 = vld [vmem:[%s0] sm:$0xf]
    %v46 = vld [vmem:[%s0 + $0x4] sm:$0xf]
    %v47 = vunpack.c.l.bf16 %v45
    %v48 = vunpack.c.l.bf16 %v46
    %v49 = vld [vmem:[%s1] sm:$0xf]
    %v50 = vld [vmem:[%s1 + $0x4] sm:$0xf]
    %v51 = vunpack.c.l.bf16 %v49
    %v52 = vunpack.c.l.bf16 %v50
    %v53 = vmul.f32 %v47, %v51
    %v54 = vmul.f32 %v48, %v52
    %v55 = vld [vmem:[%s9] sm:$0xff]
    %v56 = vld [vmem:[%s9 + $0x8] sm:$0xff]
    %58 = vset.pattern.permute.xlu0 0
    %59 = vperm.xlu0 %58, %v55
    %v60 = vpop.permute.xlu0 %59
    %63 = vset.pattern.permute.xlu0 0
    %64 = vperm.xlu0 %63, %v56
    %v65 = vpop.permute.xlu0 %64
    %v67 = vmul.f32 %v53, %v60
    %v68 = vmul.f32 %v54, %v65
    %v69 = vadd.f32 %v67, %v68
    %v70 = vrot.slane %v69, 4
    %v71 = vadd.f32 %v69, %v70
    %v72 = vrot.slane %v71, 2
    %v73 = vadd.f32 %v71, %v72
    %v74 = vrot.slane %v73, 1
    %v75 = vadd.f32 %v73, %v74
    %v76 = vld [vmem:[%s4] sm:$0xf]
    %v77 = vld [vmem:[%s4 + $0x4] sm:$0xf]
    %v78 = vld [vmem:[%s4 + $0x8] sm:$0xf]
    %v79 = vld [vmem:[%s4 + $0xc] sm:$0xf]
    %v80 = vld [vmem:[%s2] sm:$0xf]
    %v81 = vld [vmem:[%s2 + $0x4] sm:$0xf]
    %v82 = vld [vmem:[%s5] sm:$0xf]
    %v83 = vld [vmem:[%s5 + $0x4] sm:$0xf]
    %v84 = vld [vmem:[%s5 + $0x8] sm:$0xf]
    %v85 = vld [vmem:[%s5 + $0xc] sm:$0xf]
    %v86 = vld [vmem:[%s3] sm:$0xf]
    %v87 = vld [vmem:[%s3 + $0x4] sm:$0xf]
    %v92 = vunpack.c.l.b16 %v82
    %v93 = vunpack.c.l.b16 %v83
    %v94 = vunpack.c.l.b16 %v84
    %v95 = vunpack.c.l.b16 %v85
    %v96 = vpack.c.b16 %v93, %v92
    %v97 = vpack.c.b16 %v95, %v94
    %v100 = vunpack.c.l.b16 %v86
    %v101 = vunpack.c.l.b16 %v87
    %v102 = vpack.c.b16 %v101, %v100
    %vm104 = vcmask 130048
    %v106 = vsel %vm104, %v96, 0
    %v109 = vsel %vm104, %v97, 0
    %111 = vmatprep.subr.bf16.mxu0 0
    %112 = vmatpush1.bf16.msra.mxu0 %v102
    %113 = vmatprep.subr.bf16.mxu0 0
    %114 = vmatpush1.bf16.msra.mxu0 0
    %115 = vmatprep.subr.bf16.mxu0 0
    %116 = vmatpush1.bf16.msra.mxu0 0
    %117 = vmatprep.subr.bf16.mxu0 0
    %118 = vmatpush1.bf16.msra.mxu0 0
    %119 = vmatprep.subr.bf16.mxu0 0
    %120 = vmatpush1.bf16.msra.mxu0 0
    %121 = vmatprep.subr.bf16.mxu0 0
    %122 = vmatpush1.bf16.msra.mxu0 0
    %123 = vmatprep.subr.bf16.mxu0 0
    %124 = vmatpush1.bf16.msra.mxu0 0
    %125 = vmatprep.subr.bf16.mxu0 0
    %126 = vmatpush1.bf16.msra.mxu0 0
    %127 = vmatprep.subr.bf16.mxu0 0
    %128 = vmatpush1.bf16.msra.mxu0 0
    %129 = vmatprep.subr.bf16.mxu0 0
    %130 = vmatpush1.bf16.msra.mxu0 0
    %131 = vmatprep.subr.bf16.mxu0 0
    %132 = vmatpush1.bf16.msra.mxu0 0
    %133 = vmatprep.subr.bf16.mxu0 0
    %134 = vmatpush1.bf16.msra.mxu0 0
    %135 = vmatprep.subr.bf16.mxu0 0
    %136 = vmatpush1.bf16.msra.mxu0 0
    %137 = vmatprep.subr.bf16.mxu0 0
    %138 = vmatpush1.bf16.msra.mxu0 0
    %139 = vmatprep.subr.bf16.mxu0 0
    %140 = vmatpush1.bf16.msra.mxu0 0
    %141 = vmatprep.subr.bf16.mxu0 0
    %142 = vmatpush1.bf16.msra.mxu0 0
    %143 = vmatprep.mubr.bf16.mxu0 0
    %144 = vmatmul.mubr.bf16.gmra.mrb[0].mxu0 %v106
    %v145 = vpop.f32.mrb[0].mxu0
    %v146 = vadd.f32 0.0, %v145
    %v147 = vpop.f32.mrb[0].mxu0
    %v148 = vpop.f32.mrb[0].mxu0
    %v149 = vadd.f32 0.0, %v148
    %v150 = vpop.f32.mrb[0].mxu0
    %151 = vmatprep.mubr.bf16.mxu0 0
    %152 = vmatmul.mubr.bf16.gmra.mrb[0].mxu0 %v109
    %v153 = vpop.f32.mrb[0].mxu0
    %v154 = vadd.f32 0.0, %v153
    %v155 = vpop.f32.mrb[0].mxu0
    %v156 = vpop.f32.mrb[0].mxu0
    %v157 = vadd.f32 0.0, %v156
    %v158 = vpop.f32.mrb[0].mxu0
    %159 = vdwg.mxu0
    %v164 = vunpack.c.l.b16 %v76
    %v165 = vunpack.c.l.b16 %v77
    %v166 = vunpack.c.l.b16 %v78
    %v167 = vunpack.c.l.b16 %v79
    %v168 = vpack.c.b16 %v165, %v164
    %v169 = vpack.c.b16 %v167, %v166
    %v172 = vunpack.c.l.b16 %v80
    %v173 = vunpack.c.l.b16 %v81
    %v174 = vpack.c.b16 %v173, %v172
    %v177 = vsel %vm104, %v168, 0
    %v180 = vsel %vm104, %v169, 0
    %182 = vmatprep.subr.bf16.mxu0 0
    %183 = vmatpush1.bf16.msra.mxu0 %v174
    %184 = vmatprep.subr.bf16.mxu0 0
    %185 = vmatpush1.bf16.msra.mxu0 0
    %186 = vmatprep.subr.bf16.mxu0 0
    %187 = vmatpush1.bf16.msra.mxu0 0
    %188 = vmatprep.subr.bf16.mxu0 0
    %189 = vmatpush1.bf16.msra.mxu0 0
    %190 = vmatprep.subr.bf16.mxu0 0
    %191 = vmatpush1.bf16.msra.mxu0 0
    %192 = vmatprep.subr.bf16.mxu0 0
    %193 = vmatpush1.bf16.msra.mxu0 0
    %194 = vmatprep.subr.bf16.mxu0 0
    %195 = vmatpush1.bf16.msra.mxu0 0
    %196 = vmatprep.subr.bf16.mxu0 0
    %197 = vmatpush1.bf16.msra.mxu0 0
    %198 = vmatprep.subr.bf16.mxu0 0
    %199 = vmatpush1.bf16.msra.mxu0 0
    %200 = vmatprep.subr.bf16.mxu0 0
    %201 = vmatpush1.bf16.msra.mxu0 0
    %202 = vmatprep.subr.bf16.mxu0 0
    %203 = vmatpush1.bf16.msra.mxu0 0
    %204 = vmatprep.subr.bf16.mxu0 0
    %205 = vmatpush1.bf16.msra.mxu0 0
    %206 = vmatprep.subr.bf16.mxu0 0
    %207 = vmatpush1.bf16.msra.mxu0 0
    %208 = vmatprep.subr.bf16.mxu0 0
    %209 = vmatpush1.bf16.msra.mxu0 0
    %210 = vmatprep.subr.bf16.mxu0 0
    %211 = vmatpush1.bf16.msra.mxu0 0
    %212 = vmatprep.subr.bf16.mxu0 0
    %213 = vmatpush1.bf16.msra.mxu0 0
    %214 = vmatprep.mubr.bf16.mxu0 0
    %215 = vmatmul.mubr.bf16.gmra.mrb[0].mxu0 %v177
    %v216 = vpop.f32.mrb[0].mxu0
    %v217 = vadd.f32 %v146, %v216
    %v218 = vpop.f32.mrb[0].mxu0
    %v219 = vpop.f32.mrb[0].mxu0
    %v220 = vadd.f32 %v149, %v219
    %v221 = vpop.f32.mrb[0].mxu0
    %222 = vmatprep.mubr.bf16.mxu0 0
    %223 = vmatmul.mubr.bf16.gmra.mrb[0].mxu0 %v180
    %v224 = vpop.f32.mrb[0].mxu0
    %v225 = vadd.f32 %v154, %v224
    %v226 = vpop.f32.mrb[0].mxu0
    %v227 = vpop.f32.mrb[0].mxu0
    %v228 = vadd.f32 %v157, %v227
    %v229 = vpop.f32.mrb[0].mxu0
    %230 = vdwg.mxu0
    %v231 = vld [vmem:[%s6] sm:$0xff]
    %v232 = vld [vmem:[%s6 + $0x8] sm:$0xff]
    %v233 = vld [vmem:[%s6 + $0x10] sm:$0xff]
    %v234 = vld [vmem:[%s6 + $0x18] sm:$0xff]
    %236 = vset.pattern.permute.xlu0 0
    %237 = vperm.xlu0 %236, %v231
    %v238 = vpop.permute.xlu0 %237
    %241 = vset.pattern.permute.xlu0 0
    %242 = vperm.xlu0 %241, %v232
    %v243 = vpop.permute.xlu0 %242
    %246 = vset.pattern.permute.xlu0 0
    %247 = vperm.xlu0 %246, %v233
    %v248 = vpop.permute.xlu0 %247
    %251 = vset.pattern.permute.xlu0 0
    %252 = vperm.xlu0 %251, %v234
    %v253 = vpop.permute.xlu0 %252
    %v255 = vadd.f32 %v217, %v238
    %v256 = vadd.f32 %v220, %v243
    %v257 = vadd.f32 %v225, %v248
    %v258 = vadd.f32 %v228, %v253
    %v259 = vmax.f32 %v255, 0.0
    %v260 = vmax.f32 %v256, 0.0
    %v261 = vmax.f32 %v257, 0.0
    %v262 = vmax.f32 %v258, 0.0
    %v263 = vld [vmem:[%s7] sm:$0xf]
    %v264 = vld [vmem:[%s7 + $0x4] sm:$0xf]
    %v265 = vpack.c.bf16 %v260, %v259
    %v266 = vpack.c.bf16 %v262, %v261
    %v267 = vld [vmem:[%s8] sm:$0xff]
    %v268 = vld [vmem:[%s8 + $0x8] sm:$0xff]
    %270 = vset.pattern.permute.xlu0 0
    %271 = vperm.xlu0 %270, %v267
    %v272 = vpop.permute.xlu0 %271
    %275 = vset.pattern.permute.xlu0 0
    %276 = vperm.xlu0 %275, %v268
    %v277 = vpop.permute.xlu0 %276
    %v281 = vunpack.c.l.b16 %v263
    %v282 = vunpack.c.l.b16 %v264
    %v283 = vpack.c.b16 %v282, %v281
    %vm284 = vcmask 261120
    %v286 = vsel %vm284, %v283, 0
    %288 = vmatprep.subr.bf16.mxu0 0
    %289 = vmatpush1.bf16.msra.mxu0 %v265
    %290 = vmatprep.subr.bf16.mxu0 0
    %291 = vmatpush1.bf16.msra.mxu0 %v266
    %292 = vmatprep.subr.bf16.mxu0 0
    %293 = vmatpush1.bf16.msra.mxu0 0
    %294 = vmatprep.subr.bf16.mxu0 0
    %295 = vmatpush1.bf16.msra.mxu0 0
    %296 = vmatprep.subr.bf16.mxu0 0
    %297 = vmatpush1.bf16.msra.mxu0 0
    %298 = vmatprep.subr.bf16.mxu0 0
    %299 = vmatpush1.bf16.msra.mxu0 0
    %300 = vmatprep.subr.bf16.mxu0 0
    %301 = vmatpush1.bf16.msra.mxu0 0
    %302 = vmatprep.subr.bf16.mxu0 0
    %303 = vmatpush1.bf16.msra.mxu0 0
    %304 = vmatprep.subr.bf16.mxu0 0
    %305 = vmatpush1.bf16.msra.mxu0 0
    %306 = vmatprep.subr.bf16.mxu0 0
    %307 = vmatpush1.bf16.msra.mxu0 0
    %308 = vmatprep.subr.bf16.mxu0 0
    %309 = vmatpush1.bf16.msra.mxu0 0
    %310 = vmatprep.subr.bf16.mxu0 0
    %311 = vmatpush1.bf16.msra.mxu0 0
    %312 = vmatprep.subr.bf16.mxu0 0
    %313 = vmatpush1.bf16.msra.mxu0 0
    %314 = vmatprep.subr.bf16.mxu0 0
    %315 = vmatpush1.bf16.msra.mxu0 0
    %316 = vmatprep.subr.bf16.mxu0 0
    %317 = vmatpush1.bf16.msra.mxu0 0
    %318 = vmatprep.subr.bf16.mxu0 0
    %319 = vmatpush1.bf16.msra.mxu0 0
    %320 = vmatprep.mubr.bf16.mxu0 0
    %321 = vmatmul.mubr.bf16.gmra.mrb[0].mxu0 %v286
    %v322 = vpop.f32.mrb[0].mxu0
    %v323 = vadd.f32 %v272, %v322
    %v324 = vpop.f32.mrb[0].mxu0
    %v325 = vpop.f32.mrb[0].mxu0
    %v326 = vadd.f32 %v277, %v325
    %v327 = vpop.f32.mrb[0].mxu0
    %328 = vdwg.mxu0
    %v329 = vmax.f32 %v323, 0.0
    %v330 = vmax.f32 %v326, 0.0
    %v331 = vld [vmem:[%s10] sm:$0xff]
    %v332 = vld [vmem:[%s10 + $0x8] sm:$0xff]
    %334 = vset.pattern.permute.xlu0 0
    %335 = vperm.xlu0 %334, %v331
    %v336 = vpop.permute.xlu0 %335
    %339 = vset.pattern.permute.xlu0 0
    %340 = vperm.xlu0 %339, %v332
    %v341 = vpop.permute.xlu0 %340
    %v343 = vmul.f32 %v329, %v336
    %v344 = vmul.f32 %v330, %v341
    %v345 = vadd.f32 %v343, %v344
    %v346 = vrot.slane %v345, 4
    %v347 = vadd.f32 %v345, %v346
    %v348 = vrot.slane %v347, 2
    %v349 = vadd.f32 %v347, %v348
    %v350 = vrot.slane %v349, 1
    %v351 = vadd.f32 %v349, %v350
    %v352 = vadd.f32 %v75, %v351
    %v353 = vld [vmem:[#allocation2] sm:$0x1]
    %355 = vset.pattern.permute.xlu0 0
    %356 = vperm.xlu0 %355, %v353
    %v357 = vpop.permute.xlu0 %356
    %v359 = vlaneseq
    %v360 = vshrl.u32 %v359, 7
    %v361 = vsub.s32 0, %v360
    %v362 = vrot.slane %v357, %v361
    %v363 = vadd.f32 %v352, %v362
    %364 = vst [vmem:[#allocation3] sm:$0x1] %v363
    // Predicated region
    $region50: #{tpu_custom_call.1} parent=1 // pred_check
      _
    $region51: #{tpu_custom_call.1} parent=1 // pred_check_branch
      %366 = sbr.rel (0) target = $region53
    $region52: #{tpu_custom_call.1} parent=1 // pred_region
      %s368 = ssub.s32 16, 16
      %369 = vsyncadd [#allocation4], %s368
      %s371 = sshll.u32 [#allocation3], 4
      %s372 = int_to_ptr.vmem [resolvable:$true] %s371
      %374 = dma.vmem_to_hbm [thread:$0]  %s372, 16, %s12, [#allocation4]
    $region53: #{tpu_custom_call.1} parent=1 // pred_fallthru
      _
    // Predicated region
    $region54: #{tpu_custom_call.1} parent=1 // pred_check
      _
    $region55: #{tpu_custom_call.1} parent=1 // pred_check_branch
      %376 = sbr.rel (0) target = $region57
    $region56: #{tpu_custom_call.1} parent=1 // pred_region
      %377 = dma.done [#allocation4], 16
    $region57: #{tpu_custom_call.1} parent=1 // pred_fallthru
      _
    %378 = vsyncpa [#allocation4], 1

</llo_original>
